<compile_context>
chip_gen: v6e
topology: v6e:2x2x1
jax: 0.10.0
libtpu: 0.0.40
codegen_flags: <defaults>
</compile_context>

<pallas_src>
import functools

import jax
import jax.numpy as jnp
from jax.experimental import pallas as pl
from jax.experimental.pallas import tpu as pltpu


def _round_up(x, m):
    return ((x + m - 1) // m) * m


def _sparse_coding_kernel(x_ref, dt_ref, c_ref):
    # x_ref : (tm, T)  tile of X rows           (VMEM, double-buffered)
    # dt_ref: (T, K)   whole transposed dict    (VMEM, resident: constant index map)
    # c_ref : (tm, K)  output tile  C = X @ D.T
    c_ref[...] = jnp.dot(
        x_ref[...], dt_ref[...], preferred_element_type=jnp.float32
    ).astype(c_ref.dtype)


@functools.partial(jax.jit, static_argnames=("tm",))
def sparse_coding_forward(x, dic_weight, *, tm=256):
    """C = X @ D.T computed in a Pallas kernel. Returns (C, D) like the module."""
    B, S, T = x.shape
    K, T2 = dic_weight.shape
    assert T == T2, "feature dim of X must match dictionary atom length T"

    M = B * S
    x2d = x.reshape(M, T)

    # Effective row tile: big enough to feed the 128/256-row MXU, but don't
    # over-pad tiny problems.  Must be a multiple of 8 (sublane granularity).
    tm_eff = min(tm, _round_up(M, 8))
    m_pad = _round_up(M, tm_eff)
    if m_pad != M:
        x2d = jnp.pad(x2d, ((0, m_pad - M), (0, 0)))

    # Pre-transpose D once outside the grid (cheap one-time XLA transpose of a
    # small array) so the kernel runs an 'NN'-layout matmul with no per-tile
    # relayout of the dictionary tile.
    d_t = dic_weight.T  # (T, K)

    grid = (m_pad // tm_eff,)

    in_itemsize = jnp.dtype(x.dtype).itemsize
    d_itemsize = jnp.dtype(dic_weight.dtype).itemsize
    out_dtype = jnp.float32
    out_itemsize = jnp.dtype(out_dtype).itemsize

    # VMEM budget: double-buffered X tile + (up to double-buffered) resident D
    # + double-buffered C tile, with 2x headroom; clamp to a range that is
    # safe on v5e/v6e (128 MiB physical) *and* v7x (64 MiB physical).
    # TODO(synk): if K*T grows past this headroom, fall back to tiling K with a
    # second grid axis instead of keeping D fully resident.
    want_bytes = (
        2 * tm_eff * T * in_itemsize
        + 2 * T * K * d_itemsize
        + 2 * tm_eff * K * out_itemsize
    )
    vmem_limit = int(min(max(2 * want_bytes, 16 * 1024 * 1024), 48 * 1024 * 1024))

    cost = pl.CostEstimate(
        flops=2 * m_pad * K * T,
        transcendentals=0,
        bytes_accessed=m_pad * T * in_itemsize
        + K * T * d_itemsize
        + m_pad * K * out_itemsize,
    )

    c2d = pl.pallas_call(
        _sparse_coding_kernel,
        out_shape=jax.ShapeDtypeStruct((m_pad, K), out_dtype),
        grid_spec=pltpu.PrefetchScalarGridSpec(
            num_scalar_prefetch=0,
            grid=grid,
            in_specs=[
                # X tile: row band i, full T.
                pl.BlockSpec((tm_eff, T), lambda i: (i, 0)),
                # D^T: whole array, constant block index -> stays VMEM-resident.
                pl.BlockSpec((T, K), lambda i: (0, 0)),
            ],
            out_specs=pl.BlockSpec((tm_eff, K), lambda i: (i, 0)),
        ),
        compiler_params=pltpu.CompilerParams(
            dimension_semantics=("parallel",),
            vmem_limit_bytes=vmem_limit,
        ),
        cost_estimate=cost,
    )(x2d, d_t)

    C = c2d[:M].reshape(B, S, K)
    return C, dic_weight


def init_dictionary(key, K, T, dtype=jnp.float32):
    """Deterministic kaiming_normal_ equivalent for a (K, T) weight.

    torch.nn.init.kaiming_normal_ default: mode='fan_in' (fan_in = T for 2D),
    nonlinearity='leaky_relu' with a=0  =>  gain = sqrt(2), std = sqrt(2 / T).
    """
    std = (2.0 / T) ** 0.5
    return std * jax.random.normal(key, (K, T), dtype=dtype)


if __name__ == "__main__":
    # Small but representative shapes: batch=2, seq=8, T=128 (atom length),
    # K=128 atoms.
    B, S, T, K = 2, 8, 128, 128

    key = jax.random.PRNGKey(0)
    kx, kd = jax.random.split(key)

    X = jax.random.normal(kx, (B, S, T), dtype=jnp.float32)
    D = init_dictionary(kd, K, T)

    C, D_out = sparse_coding_forward(X, D)
    jax.block_until_ready(C)
    jax.block_until_ready(D_out)

    C_ref = jnp.matmul(X, D.T)
    assert C.shape == (B, S, K)
    assert D_out.shape == (K, T)
    assert jnp.allclose(C, C_ref, atol=1e-4, rtol=1e-4)

    # Exercise the pad-and-slice path: M = 3*7 = 21 is not a tile multiple.
    B2, S2 = 3, 7
    X2 = jax.random.normal(kx, (B2, S2, T), dtype=jnp.float32)
    C2, _ = sparse_coding_forward(X2, D)
    jax.block_until_ready(C2)
    assert C2.shape == (B2, S2, K)
    assert jnp.allclose(C2, jnp.matmul(X2, D.T), atol=1e-4, rtol=1e-4)

    print("KERNEL_OK")
</pallas_src>

<mosaic_0001>
module attributes {stable_mosaic.version = 11 : i64} {
  func.func @_sparse_coding_kernel(%arg0: i32, %arg1: memref<16x128xf32, #tpu.memory_space<vmem>>, %arg2: memref<128x128xf32, #tpu.memory_space<vmem>>, %arg3: memref<16x128xf32, #tpu.memory_space<vmem>>) attributes {dimension_semantics = [#tpu.dimension_semantics<parallel>], iteration_bounds = array<i64: 1>, scalar_prefetch = 0 : i64, scratch_operands = 0 : i64, tpu.core_type = #tpu.core_type<tc>, window_params = [{transform_indices = @transform_0, window_bounds = array<i64: 16, 128>}, {pipeline_mode = #tpu.pipeline_mode<synchronous>, transform_indices = @transform_1, window_bounds = array<i64: 128, 128>}, {transform_indices = @transform_2, window_bounds = array<i64: 16, 128>}]} {
    %c0 = arith.constant 0 : index
    %c0_0 = arith.constant 0 : index
    %0 = vector.load %arg1[%c0, %c0_0] : memref<16x128xf32, #tpu.memory_space<vmem>>, vector<16x128xf32>
    %c0_1 = arith.constant 0 : index
    %c0_2 = arith.constant 0 : index
    %1 = vector.load %arg2[%c0_1, %c0_2] : memref<128x128xf32, #tpu.memory_space<vmem>>, vector<128x128xf32>
    %cst = arith.constant dense<0.000000e+00> : vector<16x128xf32>
    %2 = tpu.matmul %0, %1, %cst {dimension_numbers = #tpu.dot_dimension_numbers<[1], [0], [0], [1], [0, 0, 1, 1], [], []>} : vector<16x128xf32>, vector<128x128xf32>, vector<16x128xf32> -> vector<16x128xf32>
    %c0_3 = arith.constant 0 : index
    %c0_4 = arith.constant 0 : index
    %3 = vector.load %arg3[%c0_3, %c0_4] : memref<16x128xf32, #tpu.memory_space<vmem>>, vector<16x128xf32>
    tpu.vector_store %arg3[%c0_3, %c0_4], %2 {strides = array<i32>} : memref<16x128xf32, #tpu.memory_space<vmem>>, vector<16x128xf32>,
    return
  }
  func.func @transform_0(%arg0: i32) -> (i32, i32) {
    %c0_i32 = arith.constant 0 : i32
    %c0_i32_0 = arith.constant 0 : i32
    return %arg0, %c0_i32 : i32, i32
  }
  func.func @transform_1(%arg0: i32) -> (i32, i32) {
    %c0_i32 = arith.constant 0 : i32
    %c0_i32_0 = arith.constant 0 : i32
    %c0_i32_1 = arith.constant 0 : i32
    return %c0_i32, %c0_i32_0 : i32, i32
  }
  func.func @transform_2(%arg0: i32) -> (i32, i32) {
    %c0_i32 = arith.constant 0 : i32
    %c0_i32_0 = arith.constant 0 : i32
    return %arg0, %c0_i32 : i32, i32
  }
}

</mosaic_0001>

<llo_original>
// kernel: sparse_coding_forward.1
$region0: #{sparse_coding_forward.1}
  #allocation0 [shape = 'u32[]', space=smem, size = 0x4, offset = 0x4, fixed_abs, tag = 'smem constant byte address 0x4 - core index']
  #allocation1 [shape = 'u32[144,128]{1,0:T(1,128)}', space=vmem, size = 0x12000, scoped, tag = 'internal scratch']
  %s0 = inlined_call_operand.vmem [shape: f32[16,128], index: 0, kind: input, shape index: {}]
  %s1 = inlined_call_operand.vmem [shape: f32[128,128], index: 1, kind: input, shape index: {}]
  %s2 = inlined_call_operand.hbm [shape: f32[16,128], index: 2, kind: output, shape index: {}]
  %s3 = sld [smem:[#allocation0]]
  $region18: #{sparse_coding_forward.1} parent=0
    _
  %s5 = ssub.s32 1, %s3
  %s6 = scalar_select 0, %s5, %s3
  $region1: #{sparse_coding_forward.1} parent=0
    #allocation2 [shape = 'u8[8192]{0}', space=vmem, size = 0x2000, scoped, tag = 'output window, operand 0, single buffered']
    #allocation3 [shape = 's32[1]{0}', space=sflag, size = 0x4, scoped, tag = 'scoped memory for sparse_coding_forward.1']
    %7 = vsyncpa [#allocation3], 0
    // Predicated region
    $region2: #{sparse_coding_forward.1} parent=1 // pred_check
      _
    $region3: #{sparse_coding_forward.1} parent=1 // pred_check_branch
      %9 = sbr.rel (0) target = $region5
    $region4: #{sparse_coding_forward.1} parent=1 // pred_region
      _
    $region5: #{sparse_coding_forward.1} parent=1 // pred_fallthru
      _
    // Predicated region
    $region6: #{sparse_coding_forward.1} parent=1 // pred_check
      _
    $region7: #{sparse_coding_forward.1} parent=1 // pred_check_branch
      %11 = sbr.rel (0) target = $region9
    $region8: #{sparse_coding_forward.1} parent=1 // pred_region
      _
    $region9: #{sparse_coding_forward.1} parent=1 // pred_fallthru
      _
    %v12 = vld [vmem:[%s0] sm:$0xff]
    %v13 = vld [vmem:[%s0 + $0x8] sm:$0xff]
    %v14 = vld [vmem:[%s1] sm:$0xff]
    %v15 = vld [vmem:[%s1 + $0x8] sm:$0xff]
    %v16 = vld [vmem:[%s1 + $0x10] sm:$0xff]
    %v17 = vld [vmem:[%s1 + $0x18] sm:$0xff]
    %v18 = vld [vmem:[%s1 + $0x20] sm:$0xff]
    %v19 = vld [vmem:[%s1 + $0x28] sm:$0xff]
    %v20 = vld [vmem:[%s1 + $0x30] sm:$0xff]
    %v21 = vld [vmem:[%s1 + $0x38] sm:$0xff]
    %v22 = vld [vmem:[%s1 + $0x40] sm:$0xff]
    %v23 = vld [vmem:[%s1 + $0x48] sm:$0xff]
    %v24 = vld [vmem:[%s1 + $0x50] sm:$0xff]
    %v25 = vld [vmem:[%s1 + $0x58] sm:$0xff]
    %v26 = vld [vmem:[%s1 + $0x60] sm:$0xff]
    %v27 = vld [vmem:[%s1 + $0x68] sm:$0xff]
    %v28 = vld [vmem:[%s1 + $0x70] sm:$0xff]
    %v29 = vld [vmem:[%s1 + $0x78] sm:$0xff]
    %30 = vmatprep.subr.mxu0 0.0
    %31 = vmatpush1.msra.mxu0 %v29
    %32 = vmatprep.subr.mxu0 0.0
    %33 = vmatpush1.msra.mxu0 %v28
    %34 = vmatprep.subr.mxu0 0.0
    %35 = vmatpush1.msra.mxu0 %v27
    %36 = vmatprep.subr.mxu0 0.0
    %37 = vmatpush1.msra.mxu0 %v26
    %38 = vmatprep.subr.mxu0 0.0
    %39 = vmatpush1.msra.mxu0 %v25
    %40 = vmatprep.subr.mxu0 0.0
    %41 = vmatpush1.msra.mxu0 %v24
    %42 = vmatprep.subr.mxu0 0.0
    %43 = vmatpush1.msra.mxu0 %v23
    %44 = vmatprep.subr.mxu0 0.0
    %45 = vmatpush1.msra.mxu0 %v22
    %46 = vmatprep.subr.mxu0 0.0
    %47 = vmatpush1.msra.mxu0 %v21
    %48 = vmatprep.subr.mxu0 0.0
    %49 = vmatpush1.msra.mxu0 %v20
    %50 = vmatprep.subr.mxu0 0.0
    %51 = vmatpush1.msra.mxu0 %v19
    %52 = vmatprep.subr.mxu0 0.0
    %53 = vmatpush1.msra.mxu0 %v18
    %54 = vmatprep.subr.mxu0 0.0
    %55 = vmatpush1.msra.mxu0 %v17
    %56 = vmatprep.subr.mxu0 0.0
    %57 = vmatpush1.msra.mxu0 %v16
    %58 = vmatprep.subr.mxu0 0.0
    %59 = vmatpush1.msra.mxu0 %v15
    %60 = vmatprep.subr.mxu0 0.0
    %61 = vmatpush1.msra.mxu0 %v14
    %62 = vmatprep.subr.mxu0 0.0
    %63 = vmatpush2.msra.mxu0 0.0
    %64 = vmatprep.subr.mxu0 0.0
    %65 = vmatpush2.msra.mxu0 0.0
    %66 = vmatprep.subr.mxu0 0.0
    %67 = vmatpush2.msra.mxu0 0.0
    %68 = vmatprep.subr.mxu0 0.0
    %69 = vmatpush2.msra.mxu0 0.0
    %70 = vmatprep.subr.mxu0 0.0
    %71 = vmatpush2.msra.mxu0 0.0
    %72 = vmatprep.subr.mxu0 0.0
    %73 = vmatpush2.msra.mxu0 0.0
    %74 = vmatprep.subr.mxu0 0.0
    %75 = vmatpush2.msra.mxu0 0.0
    %76 = vmatprep.subr.mxu0 0.0
    %77 = vmatpush2.msra.mxu0 0.0
    %78 = vmatprep.subr.mxu0 0.0
    %79 = vmatpush2.msra.mxu0 0.0
    %80 = vmatprep.subr.mxu0 0.0
    %81 = vmatpush2.msra.mxu0 0.0
    %82 = vmatprep.subr.mxu0 0.0
    %83 = vmatpush2.msra.mxu0 0.0
    %84 = vmatprep.subr.mxu0 0.0
    %85 = vmatpush2.msra.mxu0 0.0
    %86 = vmatprep.subr.mxu0 0.0
    %87 = vmatpush2.msra.mxu0 0.0
    %88 = vmatprep.subr.mxu0 0.0
    %89 = vmatpush2.msra.mxu0 0.0
    %90 = vmatprep.subr.mxu0 0.0
    %91 = vmatpush2.msra.mxu0 0.0
    %92 = vmatprep.subr.mxu0 0.0
    %93 = vmatpush2.msra.mxu0 0.0
    %94 = vmatprep.mubr.f32.mxu0 0.0
    %95 = vmatmul.mubr.f32.gmra.mxu0 %v12
    %v96 = vpop.f32.mrf.mxu0
    %v97 = vadd.f32 0.0, %v96
    %v98 = vpop.f32.mrf.mxu0
    %99 = vmatprep.mubr.f32.mxu0 0.0
    %100 = vmatmul.mubr.f32.gmra.mxu0 %v13
    %v101 = vpop.f32.mrf.mxu0
    %v102 = vadd.f32 0.0, %v101
    %v103 = vpop.f32.mrf.mxu0
    %104 = vdwg.mxu0
    %105 = vst [vmem:[#allocation2] sm:$0xff] %v97
    %106 = vst [vmem:[#allocation2 + $0x8] sm:$0xff] %v102
    // Predicated region
    $region10: #{sparse_coding_forward.1} parent=1 // pred_check
      _
    $region11: #{sparse_coding_forward.1} parent=1 // pred_check_branch
      %108 = sbr.rel (0) target = $region13
    $region12: #{sparse_coding_forward.1} parent=1 // pred_region
      %s110 = ssub.s32 256, 256
      %111 = vsyncadd [#allocation3], %s110
      %s112 = sshll.u32 [#allocation2], 4
      %s113 = int_to_ptr.vmem [resolvable:$true] %s112
      %118 = dma.vmem_to_hbm [thread:$0]  %s113, 256, %s2, [#allocation3], 128, 128, 8
    $region13: #{sparse_coding_forward.1} parent=1 // pred_fallthru
      _
    // Predicated region
    $region14: #{sparse_coding_forward.1} parent=1 // pred_check
      _
    $region15: #{sparse_coding_forward.1} parent=1 // pred_check_branch
      %120 = sbr.rel (0) target = $region17
    $region16: #{sparse_coding_forward.1} parent=1 // pred_region
      %121 = dma.done [#allocation3], 256
    $region17: #{sparse_coding_forward.1} parent=1 // pred_fallthru
      _
    %122 = vsyncpa [#allocation3], 1

</llo_original>
